<compile_context>
chip_gen: v5e
topology: v5e:2x2
jax: 0.10.0
libtpu: 0.0.40
codegen_flags: <defaults>
</compile_context>

<pallas_src>
import functools

import jax
import jax.numpy as jnp
from jax import lax
from jax.experimental import pallas as pl
from jax.experimental.pallas import tpu as pltpu

_LANE = 128                  # lane width (f32 & bf16)
_SUBLANE = 8                 # f32 sublane multiple
_MAX_BATCH_TILE = 1024       # bigger tiles amortize per-step overhead (v5e/v6e VMEM is ample)
_MIN_BATCH_FOR_SPLIT = 128   # force >=2 grid steps above this so v7x uses both TCs


def _round_up(n, m):
    return ((n + m - 1) // m) * m


def _cdiv(a, b):
    return -(-a // b)


# ----------------------------------------------------------------------------
# Fused kernel
# ----------------------------------------------------------------------------
def _make_combnet_kernel(num_branches):
    """One batch tile, all L+1 branches.

    refs = (x, w0, [wa_1, ba_1, wb_1, ..., wa_L, ba_L, wb_L], out)
      x    : (bt, in_pad)            f32
      w0   : (out_pad, in_pad)       bf16  (emb rows at column offset 0, rest zero)
      wa_i : (hid_pad_i, prev_pad)   bf16
      ba_i : (1, hid_pad_i)          f32
      wb_i : (out_pad, hid_pad_i)    bf16  (emb rows at column offset i*emb, rest zero)
      out  : (bt, out_pad)           f32   (single lane-dense store)
    """

    def kernel(*refs):
        x_ref = refs[0]
        w0_ref = refs[1]
        out_ref = refs[-1]
        branch_refs = refs[2:-1]

        def dot_t(a_bf16, w_bf16):
            # (bt, k) x (n, k) -> (bt, n); contract last dims (nn.Linear layout),
            # bf16 operands straight into the MXU, f32 accumulation.
            return lax.dot_general(
                a_bf16, w_bf16, (((1,), (1,)), ((), ())),
                preferred_element_type=jnp.float32)

        def l2norm(v):
            # Columns outside this branch's slot are exact zeros, so the row sum
            # equals the per-branch squared norm.  Keep the 1e-10 epsilon (padded
            # batch rows rely on it to avoid 0/0).
            normp = jnp.sum(v * v, axis=-1, keepdims=True) + 1e-10
            return v * lax.rsqrt(normp)

        h = x_ref[...]                               # f32 activations
        hb = h.astype(jnp.bfloat16)                  # MXU operand
        acc = l2norm(dot_t(hb, w0_ref[...]))         # branch 0 -> columns [0:emb)

        for i in range(num_branches):                # static unroll; tiny layer count
            wa = branch_refs[3 * i][...]
            ba = branch_refs[3 * i + 1][...]         # (1, hid) broadcasts over batch
            wb = branch_refs[3 * i + 2][...]
            h = jnp.maximum(dot_t(hb, wa) + ba, 0.0)  # f32 bias-add / ReLU
            hb = h.astype(jnp.bfloat16)
            # Branch i+1 lands in columns [(i+1)*emb : (i+2)*emb); elsewhere zero.
            acc = acc + l2norm(dot_t(hb, wb))

        out_ref[...] = acc

    return kernel


# ----------------------------------------------------------------------------
# Parameter construction / packing
# ----------------------------------------------------------------------------
def init_combnet_params(key, in_dim, hidden_sizes, embedding_size):
    """Deterministic parameter init mirroring CombNet.__init__ shapes (f32)."""
    params = {}
    k, sub = jax.random.split(key)
    # branch 0: Linear(in_dim, embedding_size, bias=False)
    params["w0"] = jax.random.normal(sub, (embedding_size, in_dim), jnp.float32) * 0.1

    last = in_dim
    params["branches"] = []
    for h in hidden_sizes:
        k, ka, kb, kw = jax.random.split(k, 4)
        wa = jax.random.normal(ka, (h, last), jnp.float32) * 0.1            # Linear(last, h)
        ba = jax.random.normal(kb, (h,), jnp.float32) * 0.1
        wb = jax.random.normal(kw, (embedding_size, h), jnp.float32) * 0.1  # Linear(h, emb, bias=False)
        params["branches"].append((wa, ba, wb))
        last = h
    return params


def pack_combnet_params(params):
    """One-time packing (outside the per-call hot path):
      * in_dim / hidden dims zero-padded to 128 (lane-dense tiles; padded bias = 0 so
        ReLU(0+0)=0 keeps the math identical),
      * every output projection zero-padded along its OUTPUT dim to the packed width
        with its emb rows placed at that branch's column offset,
      * weights cast to bf16 (MXU-native), biases kept f32.
    """
    emb, in_dim = params["w0"].shape
    num_branches = len(params["branches"])
    out_pad = _round_up((num_branches + 1) * emb, _LANE)
    in_pad = _round_up(in_dim, _LANE)

    def place_out_proj(w, branch_idx, k_pad):
        ww = jnp.zeros((out_pad, k_pad), jnp.float32)
        ww = ww.at[branch_idx * emb:(branch_idx + 1) * emb, :w.shape[1]].set(w)
        return ww.astype(jnp.bfloat16)

    packed = {"w0": place_out_proj(params["w0"], 0, in_pad), "branches": []}
    prev_pad = in_pad
    for i, (wa, ba, wb) in enumerate(params["branches"]):
        hid = wa.shape[0]
        hid_pad = _round_up(hid, _LANE)
        wa_p = jnp.zeros((hid_pad, prev_pad), jnp.float32)
        wa_p = wa_p.at[:hid, :wa.shape[1]].set(wa).astype(jnp.bfloat16)
        ba_p = jnp.zeros((1, hid_pad), jnp.float32).at[0, :hid].set(ba)
        wb_p = place_out_proj(wb, i + 1, hid_pad)
        packed["branches"].append((wa_p, ba_p, wb_p))
        prev_pad = hid_pad
    return packed


# ----------------------------------------------------------------------------
# Forward
# ----------------------------------------------------------------------------
def _choose_batch_tiling(batch):
    # Balanced tiles: per-tile padding waste < _SUBLANE rows; force >=2 grid steps for
    # non-trivial batches so the "parallel" grid axis can use both v7x TensorCores
    # (extra steps are a harmless ~0.35 us each on single-TC v5e/v6e).
    num_tiles = max(_cdiv(batch, _MAX_BATCH_TILE),
                    2 if batch >= _MIN_BATCH_FOR_SPLIT else 1)
    bt = _round_up(_cdiv(batch, num_tiles), _SUBLANE)
    num_tiles = _cdiv(batch, bt)
    return bt, num_tiles


@functools.partial(jax.jit, static_argnames=("embedding_size",))
def combnet_forward(packed, x, embedding_size):
    """Equivalent of CombNet.forward(x, layer_idx=None) -> (L+1, batch, emb)."""
    if x.ndim == 1:
        x = x.reshape(1, -1)
    x = x.astype(jnp.float32)
    batch, in_dim = x.shape

    w0 = packed["w0"]
    branches = packed["branches"]
    num_branches = len(branches)
    out_pad, in_pad = w0.shape
    out_width = (num_branches + 1) * embedding_size

    bt, num_tiles = _choose_batch_tiling(batch)
    batch_pad = bt * num_tiles
    x = jnp.pad(x, ((0, batch_pad - batch), (0, in_pad - in_dim)))

    flat_inputs = [x, w0]
    in_specs = [
        pl.BlockSpec((bt, in_pad), lambda i: (i, 0)),   # batch-tiled activation
        pl.BlockSpec(w0.shape, lambda i: (0, 0)),       # weights: full, resident
    ]
    for wa, ba, wb in branches:
        flat_inputs += [wa, ba, wb]
        in_specs += [
            pl.BlockSpec(wa.shape, lambda i: (0, 0)),
            pl.BlockSpec(ba.shape, lambda i: (0, 0)),
            pl.BlockSpec(wb.shape, lambda i: (0, 0)),
        ]

    # Advisory cost estimate (matmul flops, rsqrt transcendentals, HBM bytes).
    flops = 2 * batch_pad * in_pad * out_pad
    prev = in_pad
    for wa, _, _ in branches:
        hid = wa.shape[0]
        flops += 2 * batch_pad * (prev * hid + hid * out_pad)
        prev = hid
    bytes_accessed = (int(x.size) * 4 + batch_pad * out_pad * 4
                      + sum(int(a.size) * a.dtype.itemsize for a in flat_inputs[1:]))
    cost = pl.CostEstimate(flops=flops,
                           transcendentals=(num_branches + 1) * batch_pad,
                           bytes_accessed=bytes_accessed)

    out = pl.pallas_call(
        _make_combnet_kernel(num_branches),
        out_shape=jax.ShapeDtypeStruct((batch_pad, out_pad), jnp.float32),
        grid=(num_tiles,),
        in_specs=in_specs,
        out_specs=pl.BlockSpec((bt, out_pad), lambda i: (i, 0)),
        compiler_params=pltpu.CompilerParams(
            dimension_semantics=("parallel",),
            vmem_limit_bytes=64 * 1024 * 1024),
        cost_estimate=cost,
    )(*flat_inputs)

    # Strip batch / lane padding and unpack branches (columns are branch-major).
    out = out[:batch, :out_width]
    return out.reshape(batch, num_branches + 1, embedding_size).transpose(1, 0, 2)


# ----------------------------------------------------------------------------
# Pure-JAX references
# ----------------------------------------------------------------------------
def combnet_reference(params, x):
    """Exact f32 reference matching the PyTorch module."""
    x = x.astype(jnp.float32)

    def l2n(v):
        return v / jnp.sqrt(jnp.sum(v * v, axis=-1, keepdims=True) + 1e-10)

    outs = [l2n(x @ params["w0"].T)]
    h = x
    for wa, ba, wb in params["branches"]:
        h = jnp.maximum(h @ wa.T + ba, 0.0)
        outs.append(l2n(h @ wb.T))
    return jnp.stack(outs, axis=0)


def combnet_reference_mixed(params, x):
    """Reference using the kernel's precision policy (bf16 MXU operands, f32
    accumulation / elementwise) for a tight numerical comparison."""
    x = x.astype(jnp.float32)

    def dot_t(a, w):
        return lax.dot_general(a.astype(jnp.bfloat16), w.astype(jnp.bfloat16),
                               (((1,), (1,)), ((), ())),
                               preferred_element_type=jnp.float32)

    def l2n(v):
        return v * lax.rsqrt(jnp.sum(v * v, axis=-1, keepdims=True) + 1e-10)

    outs = [l2n(dot_t(x, params["w0"]))]
    h = x
    for wa, ba, wb in params["branches"]:
        h = jnp.maximum(dot_t(h, wa) + ba, 0.0)
        outs.append(l2n(dot_t(h, wb)))
    return jnp.stack(outs, axis=0)


# ----------------------------------------------------------------------------
# Main
# ----------------------------------------------------------------------------
if __name__ == "__main__":
    # args.L = 2, args.nn_structure = "32,32", args.embedding_size = 16
    L = 2
    hidden_sizes = [32, 32]
    embedding_size = 16
    in_dim = 32
    batch = 4

    key = jax.random.PRNGKey(0)
    kparams, kx = jax.random.split(key)
    params = init_combnet_params(kparams, in_dim, hidden_sizes, embedding_size)
    packed = pack_combnet_params(params)
    x = jax.random.normal(kx, (batch, in_dim), jnp.float32)

    out = combnet_forward(packed, x, embedding_size)
    out = jax.block_until_ready(out)
    assert out.shape == (L + 1, batch, embedding_size), out.shape

    # Tight check vs. a reference with the kernel's exact precision policy.
    ref_mixed = combnet_reference_mixed(params, x)
    assert jnp.allclose(out, ref_mixed, atol=1e-4, rtol=1e-4), "mismatch vs mixed-precision reference"

    # Looser check vs. the exact f32 PyTorch-equivalent reference (bf16 weights add
    # ~0.4% relative rounding; outputs are l2-normalized so |v| <= 1).
    ref_f32 = combnet_reference(params, x)
    assert jnp.allclose(out, ref_f32, atol=3e-2, rtol=3e-2), "mismatch vs f32 reference"

    print("KERNEL_OK")
</pallas_src>

<mosaic_0001>
module attributes {stable_mosaic.version = 11 : i64} {
  func.func @kernel(%arg0: i32, %arg1: memref<8x128xf32, #tpu.memory_space<vmem>>, %arg2: memref<128x128xbf16, #tpu.memory_space<vmem>>, %arg3: memref<128x128xbf16, #tpu.memory_space<vmem>>, %arg4: memref<1x128xf32, #tpu.memory_space<vmem>>, %arg5: memref<128x128xbf16, #tpu.memory_space<vmem>>, %arg6: memref<128x128xbf16, #tpu.memory_space<vmem>>, %arg7: memref<1x128xf32, #tpu.memory_space<vmem>>, %arg8: memref<128x128xbf16, #tpu.memory_space<vmem>>, %arg9: memref<8x128xf32, #tpu.memory_space<vmem>>) attributes {dimension_semantics = [#tpu.dimension_semantics<parallel>], iteration_bounds = array<i64: 1>, scalar_prefetch = 0 : i64, scratch_operands = 0 : i64, tpu.core_type = #tpu.core_type<tc>, window_params = [{transform_indices = @transform_0, window_bounds = array<i64: 8, 128>}, {pipeline_mode = #tpu.pipeline_mode<synchronous>, transform_indices = @transform_1, window_bounds = array<i64: 128, 128>}, {pipeline_mode = #tpu.pipeline_mode<synchronous>, transform_indices = @transform_2, window_bounds = array<i64: 128, 128>}, {pipeline_mode = #tpu.pipeline_mode<synchronous>, transform_indices = @transform_3, window_bounds = array<i64: 1, 128>}, {pipeline_mode = #tpu.pipeline_mode<synchronous>, transform_indices = @transform_4, window_bounds = array<i64: 128, 128>}, {pipeline_mode = #tpu.pipeline_mode<synchronous>, transform_indices = @transform_5, window_bounds = array<i64: 128, 128>}, {pipeline_mode = #tpu.pipeline_mode<synchronous>, transform_indices = @transform_6, window_bounds = array<i64: 1, 128>}, {pipeline_mode = #tpu.pipeline_mode<synchronous>, transform_indices = @transform_7, window_bounds = array<i64: 128, 128>}, {transform_indices = @transform_8, window_bounds = array<i64: 8, 128>}]} {
    %c0 = arith.constant 0 : index
    %c0_0 = arith.constant 0 : index
    %0 = vector.load %arg1[%c0, %c0_0] : memref<8x128xf32, #tpu.memory_space<vmem>>, vector<8x128xf32>
    %1 = arith.truncf %0 : vector<8x128xf32> to vector<8x128xbf16>
    %c0_1 = arith.constant 0 : index
    %c0_2 = arith.constant 0 : index
    %2 = vector.load %arg2[%c0_1, %c0_2] : memref<128x128xbf16, #tpu.memory_space<vmem>>, vector<128x128xbf16>
    %cst = arith.constant dense<0.000000e+00> : vector<8x128xf32>
    %3 = tpu.matmul %1, %2, %cst {dimension_numbers = #tpu.dot_dimension_numbers<[1], [1], [0], [0], [0, 0, 1, 0], [], []>} : vector<8x128xbf16>, vector<128x128xbf16>, vector<8x128xf32> -> vector<8x128xf32>
    %4 = arith.mulf %3, %3 : vector<8x128xf32>
    %cst_3 = arith.constant dense<0.000000e+00> : vector<8xf32>
    %5 = vector.multi_reduction <add>, %4, %cst_3 [1] : vector<8x128xf32> to vector<8xf32>
    %6 = vector.shape_cast %5 : vector<8xf32> to vector<8x1xf32>
    %cst_4 = arith.constant 1.000000e-10 : f32
    %7 = vector.broadcast %cst_4 : f32 to vector<8x1xf32>
    %8 = arith.addf %6, %7 : vector<8x1xf32>
    %9 = math.rsqrt %8 : vector<8x1xf32>
    %10 = vector.broadcast %9 : vector<8x1xf32> to vector<8x128xf32>
    %11 = arith.mulf %3, %10 : vector<8x128xf32>
    %c0_5 = arith.constant 0 : index
    %c0_6 = arith.constant 0 : index
    %12 = vector.load %arg3[%c0_5, %c0_6] : memref<128x128xbf16, #tpu.memory_space<vmem>>, vector<128x128xbf16>
    %c0_7 = arith.constant 0 : index
    %c0_8 = arith.constant 0 : index
    %13 = vector.load %arg4[%c0_7, %c0_8] : memref<1x128xf32, #tpu.memory_space<vmem>>, vector<1x128xf32>
    %c0_9 = arith.constant 0 : index
    %c0_10 = arith.constant 0 : index
    %14 = vector.load %arg5[%c0_9, %c0_10] : memref<128x128xbf16, #tpu.memory_space<vmem>>, vector<128x128xbf16>
    %cst_11 = arith.constant dense<0.000000e+00> : vector<8x128xf32>
    %15 = tpu.matmul %1, %12, %cst_11 {dimension_numbers = #tpu.dot_dimension_numbers<[1], [1], [0], [0], [0, 0, 1, 0], [], []>} : vector<8x128xbf16>, vector<128x128xbf16>, vector<8x128xf32> -> vector<8x128xf32>
    %16 = vector.broadcast %13 : vector<1x128xf32> to vector<8x128xf32>
    %17 = arith.addf %15, %16 : vector<8x128xf32>
    %cst_12 = arith.constant 0.000000e+00 : f32
    %18 = vector.broadcast %cst_12 : f32 to vector<8x128xf32>
    %19 = arith.maximumf %17, %18 : vector<8x128xf32>
    %20 = arith.truncf %19 : vector<8x128xf32> to vector<8x128xbf16>
    %cst_13 = arith.constant dense<0.000000e+00> : vector<8x128xf32>
    %21 = tpu.matmul %20, %14, %cst_13 {dimension_numbers = #tpu.dot_dimension_numbers<[1], [1], [0], [0], [0, 0, 1, 0], [], []>} : vector<8x128xbf16>, vector<128x128xbf16>, vector<8x128xf32> -> vector<8x128xf32>
    %22 = arith.mulf %21, %21 : vector<8x128xf32>
    %cst_14 = arith.constant dense<0.000000e+00> : vector<8xf32>
    %23 = vector.multi_reduction <add>, %22, %cst_14 [1] : vector<8x128xf32> to vector<8xf32>
    %24 = vector.shape_cast %23 : vector<8xf32> to vector<8x1xf32>
    %cst_15 = arith.constant 1.000000e-10 : f32
    %25 = vector.broadcast %cst_15 : f32 to vector<8x1xf32>
    %26 = arith.addf %24, %25 : vector<8x1xf32>
    %27 = math.rsqrt %26 : vector<8x1xf32>
    %28 = vector.broadcast %27 : vector<8x1xf32> to vector<8x128xf32>
    %29 = arith.mulf %21, %28 : vector<8x128xf32>
    %30 = arith.addf %11, %29 : vector<8x128xf32>
    %c0_16 = arith.constant 0 : index
    %c0_17 = arith.constant 0 : index
    %31 = vector.load %arg6[%c0_16, %c0_17] : memref<128x128xbf16, #tpu.memory_space<vmem>>, vector<128x128xbf16>
    %c0_18 = arith.constant 0 : index
    %c0_19 = arith.constant 0 : index
    %32 = vector.load %arg7[%c0_18, %c0_19] : memref<1x128xf32, #tpu.memory_space<vmem>>, vector<1x128xf32>
    %c0_20 = arith.constant 0 : index
    %c0_21 = arith.constant 0 : index
    %33 = vector.load %arg8[%c0_20, %c0_21] : memref<128x128xbf16, #tpu.memory_space<vmem>>, vector<128x128xbf16>
    %cst_22 = arith.constant dense<0.000000e+00> : vector<8x128xf32>
    %34 = tpu.matmul %20, %31, %cst_22 {dimension_numbers = #tpu.dot_dimension_numbers<[1], [1], [0], [0], [0, 0, 1, 0], [], []>} : vector<8x128xbf16>, vector<128x128xbf16>, vector<8x128xf32> -> vector<8x128xf32>
    %35 = vector.broadcast %32 : vector<1x128xf32> to vector<8x128xf32>
    %36 = arith.addf %34, %35 : vector<8x128xf32>
    %cst_23 = arith.constant 0.000000e+00 : f32
    %37 = vector.broadcast %cst_23 : f32 to vector<8x128xf32>
    %38 = arith.maximumf %36, %37 : vector<8x128xf32>
    %39 = arith.truncf %38 : vector<8x128xf32> to vector<8x128xbf16>
    %cst_24 = arith.constant dense<0.000000e+00> : vector<8x128xf32>
    %40 = tpu.matmul %39, %33, %cst_24 {dimension_numbers = #tpu.dot_dimension_numbers<[1], [1], [0], [0], [0, 0, 1, 0], [], []>} : vector<8x128xbf16>, vector<128x128xbf16>, vector<8x128xf32> -> vector<8x128xf32>
    %41 = arith.mulf %40, %40 : vector<8x128xf32>
    %cst_25 = arith.constant dense<0.000000e+00> : vector<8xf32>
    %42 = vector.multi_reduction <add>, %41, %cst_25 [1] : vector<8x128xf32> to vector<8xf32>
    %43 = vector.shape_cast %42 : vector<8xf32> to vector<8x1xf32>
    %cst_26 = arith.constant 1.000000e-10 : f32
    %44 = vector.broadcast %cst_26 : f32 to vector<8x1xf32>
    %45 = arith.addf %43, %44 : vector<8x1xf32>
    %46 = math.rsqrt %45 : vector<8x1xf32>
    %47 = vector.broadcast %46 : vector<8x1xf32> to vector<8x128xf32>
    %48 = arith.mulf %40, %47 : vector<8x128xf32>
    %49 = arith.addf %30, %48 : vector<8x128xf32>
    %c0_27 = arith.constant 0 : index
    %c0_28 = arith.constant 0 : index
    %50 = vector.load %arg9[%c0_27, %c0_28] : memref<8x128xf32, #tpu.memory_space<vmem>>, vector<8x128xf32>
    tpu.vector_store %arg9[%c0_27, %c0_28], %49 {strides = array<i32>} : memref<8x128xf32, #tpu.memory_space<vmem>>, vector<8x128xf32>,
    return
  }
  func.func @transform_0(%arg0: i32) -> (i32, i32) {
    %c0_i32 = arith.constant 0 : i32
    %c0_i32_0 = arith.constant 0 : i32
    return %arg0, %c0_i32 : i32, i32
  }
  func.func @transform_1(%arg0: i32) -> (i32, i32) {
    %c0_i32 = arith.constant 0 : i32
    %c0_i32_0 = arith.constant 0 : i32
    %c0_i32_1 = arith.constant 0 : i32
    return %c0_i32, %c0_i32_0 : i32, i32
  }
  func.func @transform_2(%arg0: i32) -> (i32, i32) {
    %c0_i32 = arith.constant 0 : i32
    %c0_i32_0 = arith.constant 0 : i32
    %c0_i32_1 = arith.constant 0 : i32
    return %c0_i32, %c0_i32_0 : i32, i32
  }
  func.func @transform_3(%arg0: i32) -> (i32, i32) {
    %c0_i32 = arith.constant 0 : i32
    %c0_i32_0 = arith.constant 0 : i32
    %c0_i32_1 = arith.constant 0 : i32
    return %c0_i32, %c0_i32_0 : i32, i32
  }
  func.func @transform_4(%arg0: i32) -> (i32, i32) {
    %c0_i32 = arith.constant 0 : i32
    %c0_i32_0 = arith.constant 0 : i32
    %c0_i32_1 = arith.constant 0 : i32
    return %c0_i32, %c0_i32_0 : i32, i32
  }
  func.func @transform_5(%arg0: i32) -> (i32, i32) {
    %c0_i32 = arith.constant 0 : i32
    %c0_i32_0 = arith.constant 0 : i32
    %c0_i32_1 = arith.constant 0 : i32
    return %c0_i32, %c0_i32_0 : i32, i32
  }
  func.func @transform_6(%arg0: i32) -> (i32, i32) {
    %c0_i32 = arith.constant 0 : i32
    %c0_i32_0 = arith.constant 0 : i32
    %c0_i32_1 = arith.constant 0 : i32
    return %c0_i32, %c0_i32_0 : i32, i32
  }
  func.func @transform_7(%arg0: i32) -> (i32, i32) {
    %c0_i32 = arith.constant 0 : i32
    %c0_i32_0 = arith.constant 0 : i32
    %c0_i32_1 = arith.constant 0 : i32
    return %c0_i32, %c0_i32_0 : i32, i32
  }
  func.func @transform_8(%arg0: i32) -> (i32, i32) {
    %c0_i32 = arith.constant 0 : i32
    %c0_i32_0 = arith.constant 0 : i32
    return %arg0, %c0_i32 : i32, i32
  }
}

</mosaic_0001>

<llo_original>
// kernel: combnet_forward.1
$region0: #{combnet_forward.1}
  #allocation0 [shape = 'u32[]', space=smem, size = 0x4, offset = 0x4, fixed_abs, tag = 'smem constant byte address 0x4 - core index']
  #allocation1 [shape = 'u32[72,128]{1,0:T(1,128)}', space=vmem, size = 0x9000, scoped, tag = 'internal scratch']
  %s0 = inlined_call_operand.vmem [shape: f32[8,128], index: 0, kind: input, shape index: {}]
  %s1 = inlined_call_operand.hbm [shape: bf16[128,128], index: 1, kind: input, shape index: {}]
  %s2 = inlined_call_operand.hbm [shape: bf16[128,128], index: 2, kind: input, shape index: {}]
  %s3 = inlined_call_operand.vmem [shape: f32[1,128], index: 3, kind: input, shape index: {}]
  %s4 = inlined_call_operand.hbm [shape: bf16[128,128], index: 4, kind: input, shape index: {}]
  %s5 = inlined_call_operand.hbm [shape: bf16[128,128], index: 5, kind: input, shape index: {}]
  %s6 = inlined_call_operand.vmem [shape: f32[1,128], index: 6, kind: input, shape index: {}]
  %s7 = inlined_call_operand.hbm [shape: bf16[128,128], index: 7, kind: input, shape index: {}]
  %s8 = inlined_call_operand.vmem [shape: f32[8,128], index: 8, kind: output, shape index: {}]
  %s9 = sld [smem:[#allocation0]]
  $region62: #{combnet_forward.1} parent=0
    _
  %s11 = ssub.s32 1, %s9
  %s12 = scalar_select 0, %s11, %s9
  $region1: #{combnet_forward.1} parent=0
    #allocation2 [shape = 'u8[32768]{0}', space=vmem, size = 0x8000, scoped, tag = 'input window, operand 1, single buffered']
    #allocation3 [shape = 's32[1]{0}', space=sflag, size = 0x4, scoped, tag = 'scoped memory for combnet_forward.1']
    #allocation4 [shape = 'u8[32768]{0}', space=vmem, size = 0x8000, scoped, tag = 'input window, operand 2, single buffered']
    #allocation5 [shape = 's32[1]{0}', space=sflag, size = 0x4, scoped, tag = 'scoped memory for combnet_forward.1']
    #allocation6 [shape = 'u8[32768]{0}', space=vmem, size = 0x8000, scoped, tag = 'input window, operand 4, single buffered']
    #allocation7 [shape = 'u8[32768]{0}', space=vmem, size = 0x8000, scoped, tag = 'input window, operand 5, single buffered']
    #allocation8 [shape = 's32[1]{0}', space=sflag, size = 0x4, scoped, tag = 'scoped memory for combnet_forward.1']
    #allocation9 [shape = 'u8[32768]{0}', space=vmem, size = 0x8000, scoped, tag = 'input window, operand 7, single buffered']
    %13 = vsyncpa [#allocation3], 0
    %14 = vsyncpa [#allocation5], 0
    %15 = vsyncpa [#allocation8], 0
    // Predicated region
    $region2: #{combnet_forward.1} parent=1 // pred_check
      _
    $region3: #{combnet_forward.1} parent=1 // pred_check_branch
      %17 = sbr.rel (0) target = $region5
    $region4: #{combnet_forward.1} parent=1 // pred_region
      _
    $region5: #{combnet_forward.1} parent=1 // pred_fallthru
      _
    // Predicated region
    $region6: #{combnet_forward.1} parent=1 // pred_check
      _
    $region7: #{combnet_forward.1} parent=1 // pred_check_branch
      %19 = sbr.rel (0) target = $region9
    $region8: #{combnet_forward.1} parent=1 // pred_region
      %21 = vsyncadd [#allocation3], 0
      %s22 = sshll.u32 %s1, 4
      %s23 = int_to_ptr.hbm [resolvable:$true] %s22
      %s24 = sshll.u32 [#allocation2], 4
      %s25 = int_to_ptr.vmem [resolvable:$true] %s24
      %30 = dma.hbm_to_vmem [thread:$0]  %s23, 1024, %s25, [#allocation3], 64, 64, 4
    $region9: #{combnet_forward.1} parent=1 // pred_fallthru
      _
    // Predicated region
    $region10: #{combnet_forward.1} parent=1 // pred_check
      _
    $region11: #{combnet_forward.1} parent=1 // pred_check_branch
      %32 = sbr.rel (0) target = $region13
    $region12: #{combnet_forward.1} parent=1 // pred_region
      %34 = vsyncadd [#allocation5], 0
      %s35 = sshll.u32 %s2, 4
      %s36 = int_to_ptr.hbm [resolvable:$true] %s35
      %s37 = sshll.u32 [#allocation4], 4
      %s38 = int_to_ptr.vmem [resolvable:$true] %s37
      %43 = dma.hbm_to_vmem [thread:$0]  %s36, 1024, %s38, [#allocation5], 64, 64, 4
    $region13: #{combnet_forward.1} parent=1 // pred_fallthru
      _
    // Predicated region
    $region14: #{combnet_forward.1} parent=1 // pred_check
      _
    $region15: #{combnet_forward.1} parent=1 // pred_check_branch
      %45 = sbr.rel (0) target = $region17
    $region16: #{combnet_forward.1} parent=1 // pred_region
      _
    $region17: #{combnet_forward.1} parent=1 // pred_fallthru
      _
    // Predicated region
    $region18: #{combnet_forward.1} parent=1 // pred_check
      _
    $region19: #{combnet_forward.1} parent=1 // pred_check_branch
      %47 = sbr.rel (0) target = $region21
    $region20: #{combnet_forward.1} parent=1 // pred_region
      %49 = vsyncadd [#allocation5], 0
      %s50 = sshll.u32 %s4, 4
      %s51 = int_to_ptr.hbm [resolvable:$true] %s50
      %s52 = sshll.u32 [#allocation6], 4
      %s53 = int_to_ptr.vmem [resolvable:$true] %s52
      %58 = dma.hbm_to_vmem [thread:$0]  %s51, 1024, %s53, [#allocation5], 64, 64, 4
    $region21: #{combnet_forward.1} parent=1 // pred_fallthru
      _
    // Predicated region
    $region22: #{combnet_forward.1} parent=1 // pred_check
      _
    $region23: #{combnet_forward.1} parent=1 // pred_check_branch
      %60 = sbr.rel (0) target = $region25
    $region24: #{combnet_forward.1} parent=1 // pred_region
      %62 = vsyncadd [#allocation8], 0
      %s63 = sshll.u32 %s5, 4
      %s64 = int_to_ptr.hbm [resolvable:$true] %s63
      %s65 = sshll.u32 [#allocation7], 4
      %s66 = int_to_ptr.vmem [resolvable:$true] %s65
      %71 = dma.hbm_to_vmem [thread:$0]  %s64, 1024, %s66, [#allocation8], 64, 64, 4
    $region25: #{combnet_forward.1} parent=1 // pred_fallthru
      _
    // Predicated region
    $region26: #{combnet_forward.1} parent=1 // pred_check
      _
    $region27: #{combnet_forward.1} parent=1 // pred_check_branch
      %73 = sbr.rel (0) target = $region29
    $region28: #{combnet_forward.1} parent=1 // pred_region
      _
    $region29: #{combnet_forward.1} parent=1 // pred_fallthru
      _
    // Predicated region
    $region30: #{combnet_forward.1} parent=1 // pred_check
      _
    $region31: #{combnet_forward.1} parent=1 // pred_check_branch
      %75 = sbr.rel (0) target = $region33
    $region32: #{combnet_forward.1} parent=1 // pred_region
      %77 = vsyncadd [#allocation8], 0
      %s78 = sshll.u32 %s7, 4
      %s79 = int_to_ptr.hbm [resolvable:$true] %s78
      %s80 = sshll.u32 [#allocation9], 4
      %s81 = int_to_ptr.vmem [resolvable:$true] %s80
      %86 = dma.hbm_to_vmem [thread:$0]  %s79, 1024, %s81, [#allocation8], 64, 64, 4
    $region33: #{combnet_forward.1} parent=1 // pred_fallthru
      _
    // Predicated region
    $region34: #{combnet_forward.1} parent=1 // pred_check
      _
    $region35: #{combnet_forward.1} parent=1 // pred_check_branch
      %88 = sbr.rel (0) target = $region37
    $region36: #{combnet_forward.1} parent=1 // pred_region
      %90 = dma.done [#allocation3], 1024
    $region37: #{combnet_forward.1} parent=1 // pred_fallthru
      _
    // Predicated region
    $region38: #{combnet_forward.1} parent=1 // pred_check
      _
    $region39: #{combnet_forward.1} parent=1 // pred_check_branch
      %92 = sbr.rel (0) target = $region41
    $region40: #{combnet_forward.1} parent=1 // pred_region
      %94 = dma.done [#allocation5], 1024
    $region41: #{combnet_forward.1} parent=1 // pred_fallthru
      _
    // Predicated region
    $region42: #{combnet_forward.1} parent=1 // pred_check
      _
    $region43: #{combnet_forward.1} parent=1 // pred_check_branch
      %96 = sbr.rel (0) target = $region45
    $region44: #{combnet_forward.1} parent=1 // pred_region
      %98 = dma.done [#allocation5], 1024
    $region45: #{combnet_forward.1} parent=1 // pred_fallthru
      _
    // Predicated region
    $region46: #{combnet_forward.1} parent=1 // pred_check
      _
    $region47: #{combnet_forward.1} parent=1 // pred_check_branch
      %100 = sbr.rel (0) target = $region49
    $region48: #{combnet_forward.1} parent=1 // pred_region
      %102 = dma.done [#allocation8], 1024
    $region49: #{combnet_forward.1} parent=1 // pred_fallthru
      _
    // Predicated region
    $region50: #{combnet_forward.1} parent=1 // pred_check
      _
    $region51: #{combnet_forward.1} parent=1 // pred_check_branch
      %104 = sbr.rel (0) target = $region53
    $region52: #{combnet_forward.1} parent=1 // pred_region
      %106 = dma.done [#allocation8], 1024
    $region53: #{combnet_forward.1} parent=1 // pred_fallthru
      _
    %v107 = vld [vmem:[%s0] sm:$0xff]
    %v108 = vpack.c.bf16 %v107, %v107
    %v109 = vld [vmem:[#allocation2] sm:$0xf]
    %v110 = vld [vmem:[#allocation2 + $0x4] sm:$0xf]
    %v111 = vld [vmem:[#allocation2 + $0x8] sm:$0xf]
    %v112 = vld [vmem:[#allocation2 + $0xc] sm:$0xf]
    %v113 = vld [vmem:[#allocation2 + $0x10] sm:$0xf]
    %v114 = vld [vmem:[#allocation2 + $0x14] sm:$0xf]
    %v115 = vld [vmem:[#allocation2 + $0x18] sm:$0xf]
    %v116 = vld [vmem:[#allocation2 + $0x1c] sm:$0xf]
    %v117 = vld [vmem:[#allocation2 + $0x20] sm:$0xf]
    %v118 = vld [vmem:[#allocation2 + $0x24] sm:$0xf]
    %v119 = vld [vmem:[#allocation2 + $0x28] sm:$0xf]
    %v120 = vld [vmem:[#allocation2 + $0x2c] sm:$0xf]
    %v121 = vld [vmem:[#allocation2 + $0x30] sm:$0xf]
    %v122 = vld [vmem:[#allocation2 + $0x34] sm:$0xf]
    %v123 = vld [vmem:[#allocation2 + $0x38] sm:$0xf]
    %v124 = vld [vmem:[#allocation2 + $0x3c] sm:$0xf]
    %v141 = vunpack.c.l.b16 %v109
    %v142 = vunpack.c.l.b16 %v110
    %v143 = vunpack.c.l.b16 %v111
    %v144 = vunpack.c.l.b16 %v112
    %v145 = vunpack.c.l.b16 %v113
    %v146 = vunpack.c.l.b16 %v114
    %v147 = vunpack.c.l.b16 %v115
    %v148 = vunpack.c.l.b16 %v116
    %v149 = vunpack.c.l.b16 %v117
    %v150 = vunpack.c.l.b16 %v118
    %v151 = vunpack.c.l.b16 %v119
    %v152 = vunpack.c.l.b16 %v120
    %v153 = vunpack.c.l.b16 %v121
    %v154 = vunpack.c.l.b16 %v122
    %v155 = vunpack.c.l.b16 %v123
    %v156 = vunpack.c.l.b16 %v124
    %v157 = vpack.c.b16 %v142, %v141
    %v158 = vpack.c.b16 %v144, %v143
    %v159 = vpack.c.b16 %v146, %v145
    %v160 = vpack.c.b16 %v148, %v147
    %v161 = vpack.c.b16 %v150, %v149
    %v162 = vpack.c.b16 %v152, %v151
    %v163 = vpack.c.b16 %v154, %v153
    %v164 = vpack.c.b16 %v156, %v155
    %173 = vmatpush.bf16.xpose.msra.mxu0 %v164
    %174 = vmatpush.bf16.xpose.msra.mxu0 %v163
    %175 = vmatpush.bf16.xpose.msra.mxu0 %v162
    %176 = vmatpush.bf16.xpose.msra.mxu0 %v161
    %177 = vmatpush.bf16.xpose.msra.mxu0 %v160
    %178 = vmatpush.bf16.xpose.msra.mxu0 %v159
    %179 = vmatpush.bf16.xpose.msra.mxu0 %v158
    %180 = vmatpush.bf16.xpose.msra.mxu0 %v157
    %181 = vmatmul.bf16.gmra.mxu0 %v108
    %v182 = vpop.f32.mrf.mxu0
    %v183 = vadd.f32 0.0, %v182
    %v184 = vpop.f32.mrf.mxu0
    %185 = vdwg.mxu0
    %v186 = vmul.f32 %v183, %v183
    %187 = vadd.xlane.f32.xlu0 %v186
    %v188 = vpop.xlane.xlu0 %187
    %v189 = vadd.f32 %v188, 1e-10
    %v190 = vrsqrt.pop %v189
    %v191 = vmul.f32 %v190, %v189
    %v192 = vmul.f32 %v191, %v190
    %v193 = vmul.f32 0.5, %v192
    %v194 = vsub.f32 1.5, %v193
    %v195 = vmul.f32 %v190, %v194
    %vm196 = vweird.f32 %v189
    %vm197 = vweird.f32 %v190
    %vm198 = vmor %vm196, %vm197
    %v199 = vsel %vm198, %v190, %v195
    %v200 = vmul.f32 %v183, %v199
    %v201 = vld [vmem:[#allocation4] sm:$0xf]
    %v202 = vld [vmem:[#allocation4 + $0x4] sm:$0xf]
    %v203 = vld [vmem:[#allocation4 + $0x8] sm:$0xf]
    %v204 = vld [vmem:[#allocation4 + $0xc] sm:$0xf]
    %v205 = vld [vmem:[#allocation4 + $0x10] sm:$0xf]
    %v206 = vld [vmem:[#allocation4 + $0x14] sm:$0xf]
    %v207 = vld [vmem:[#allocation4 + $0x18] sm:$0xf]
    %v208 = vld [vmem:[#allocation4 + $0x1c] sm:$0xf]
    %v209 = vld [vmem:[#allocation4 + $0x20] sm:$0xf]
    %v210 = vld [vmem:[#allocation4 + $0x24] sm:$0xf]
    %v211 = vld [vmem:[#allocation4 + $0x28] sm:$0xf]
    %v212 = vld [vmem:[#allocation4 + $0x2c] sm:$0xf]
    %v213 = vld [vmem:[#allocation4 + $0x30] sm:$0xf]
    %v214 = vld [vmem:[#allocation4 + $0x34] sm:$0xf]
    %v215 = vld [vmem:[#allocation4 + $0x38] sm:$0xf]
    %v216 = vld [vmem:[#allocation4 + $0x3c] sm:$0xf]
    %v217 = vld [vmem:[%s3] sm:$0x1]
    %v218 = vld [vmem:[#allocation6] sm:$0xf]
    %v219 = vld [vmem:[#allocation6 + $0x4] sm:$0xf]
    %v220 = vld [vmem:[#allocation6 + $0x8] sm:$0xf]
    %v221 = vld [vmem:[#allocation6 + $0xc] sm:$0xf]
    %v222 = vld [vmem:[#allocation6 + $0x10] sm:$0xf]
    %v223 = vld [vmem:[#allocation6 + $0x14] sm:$0xf]
    %v224 = vld [vmem:[#allocation6 + $0x18] sm:$0xf]
    %v225 = vld [vmem:[#allocation6 + $0x1c] sm:$0xf]
    %v226 = vld [vmem:[#allocation6 + $0x20] sm:$0xf]
    %v227 = vld [vmem:[#allocation6 + $0x24] sm:$0xf]
    %v228 = vld [vmem:[#allocation6 + $0x28] sm:$0xf]
    %v229 = vld [vmem:[#allocation6 + $0x2c] sm:$0xf]
    %v230 = vld [vmem:[#allocation6 + $0x30] sm:$0xf]
    %v231 = vld [vmem:[#allocation6 + $0x34] sm:$0xf]
    %v232 = vld [vmem:[#allocation6 + $0x38] sm:$0xf]
    %v233 = vld [vmem:[#allocation6 + $0x3c] sm:$0xf]
    %v235 = vperm.slane %v217, 0
    %v253 = vunpack.c.l.b16 %v201
    %v254 = vunpack.c.l.b16 %v202
    %v255 = vunpack.c.l.b16 %v203
    %v256 = vunpack.c.l.b16 %v204
    %v257 = vunpack.c.l.b16 %v205
    %v258 = vunpack.c.l.b16 %v206
    %v259 = vunpack.c.l.b16 %v207
    %v260 = vunpack.c.l.b16 %v208
    %v261 = vunpack.c.l.b16 %v209
    %v262 = vunpack.c.l.b16 %v210
    %v263 = vunpack.c.l.b16 %v211
    %v264 = vunpack.c.l.b16 %v212
    %v265 = vunpack.c.l.b16 %v213
    %v266 = vunpack.c.l.b16 %v214
    %v267 = vunpack.c.l.b16 %v215
    %v268 = vunpack.c.l.b16 %v216
    %v269 = vpack.c.b16 %v254, %v253
    %v270 = vpack.c.b16 %v256, %v255
    %v271 = vpack.c.b16 %v258, %v257
    %v272 = vpack.c.b16 %v260, %v259
    %v273 = vpack.c.b16 %v262, %v261
    %v274 = vpack.c.b16 %v264, %v263
    %v275 = vpack.c.b16 %v266, %v265
    %v276 = vpack.c.b16 %v268, %v267
    %285 = vmatpush.bf16.xpose.msra.mxu0 %v276
    %286 = vmatpush.bf16.xpose.msra.mxu0 %v275
    %287 = vmatpush.bf16.xpose.msra.mxu0 %v274
    %288 = vmatpush.bf16.xpose.msra.mxu0 %v273
    %289 = vmatpush.bf16.xpose.msra.mxu0 %v272
    %290 = vmatpush.bf16.xpose.msra.mxu0 %v271
    %291 = vmatpush.bf16.xpose.msra.mxu0 %v270
    %292 = vmatpush.bf16.xpose.msra.mxu0 %v269
    %293 = vmatmul.bf16.gmra.mxu0 %v108
    %v294 = vpop.f32.mrf.mxu0
    %v295 = vadd.f32 %v235, %v294
    %v296 = vpop.f32.mrf.mxu0
    %297 = vdwg.mxu0
    %v298 = vmax.f32 %v295, 0.0
    %v299 = vpack.c.bf16 %v298, %v298
    %v316 = vunpack.c.l.b16 %v218
    %v317 = vunpack.c.l.b16 %v219
    %v318 = vunpack.c.l.b16 %v220
    %v319 = vunpack.c.l.b16 %v221
    %v320 = vunpack.c.l.b16 %v222
    %v321 = vunpack.c.l.b16 %v223
    %v322 = vunpack.c.l.b16 %v224
    %v323 = vunpack.c.l.b16 %v225
    %v324 = vunpack.c.l.b16 %v226
    %v325 = vunpack.c.l.b16 %v227
    %v326 = vunpack.c.l.b16 %v228
    %v327 = vunpack.c.l.b16 %v229
    %v328 = vunpack.c.l.b16 %v230
    %v329 = vunpack.c.l.b16 %v231
    %v330 = vunpack.c.l.b16 %v232
    %v331 = vunpack.c.l.b16 %v233
    %v332 = vpack.c.b16 %v317, %v316
    %v333 = vpack.c.b16 %v319, %v318
    %v334 = vpack.c.b16 %v321, %v320
    %v335 = vpack.c.b16 %v323, %v322
    %v336 = vpack.c.b16 %v325, %v324
    %v337 = vpack.c.b16 %v327, %v326
    %v338 = vpack.c.b16 %v329, %v328
    %v339 = vpack.c.b16 %v331, %v330
    %348 = vmatpush.bf16.xpose.msra.mxu0 %v339
    %349 = vmatpush.bf16.xpose.msra.mxu0 %v338
    %350 = vmatpush.bf16.xpose.msra.mxu0 %v337
    %351 = vmatpush.bf16.xpose.msra.mxu0 %v336
    %352 = vmatpush.bf16.xpose.msra.mxu0 %v335
    %353 = vmatpush.bf16.xpose.msra.mxu0 %v334
    %354 = vmatpush.bf16.xpose.msra.mxu0 %v333
    %355 = vmatpush.bf16.xpose.msra.mxu0 %v332
    %356 = vmatmul.bf16.gmra.mxu0 %v299
    %v357 = vpop.f32.mrf.mxu0
    %v358 = vadd.f32 0.0, %v357
    %v359 = vpop.f32.mrf.mxu0
    %360 = vdwg.mxu0
    %v361 = vmul.f32 %v358, %v358
    %362 = vadd.xlane.f32.xlu0 %v361
    %v363 = vpop.xlane.xlu0 %362
    %v364 = vadd.f32 %v363, 1e-10
    %v365 = vrsqrt.pop %v364
    %v366 = vmul.f32 %v365, %v364
    %v367 = vmul.f32 %v366, %v365
    %v368 = vmul.f32 0.5, %v367
    %v369 = vsub.f32 1.5, %v368
    %v370 = vmul.f32 %v365, %v369
    %vm371 = vweird.f32 %v364
    %vm372 = vweird.f32 %v365
    %vm373 = vmor %vm371, %vm372
    %v374 = vsel %vm373, %v365, %v370
    %v375 = vmul.f32 %v358, %v374
    %v376 = vadd.f32 %v200, %v375
    %v377 = vld [vmem:[#allocation7] sm:$0xf]
    %v378 = vld [vmem:[#allocation7 + $0x4] sm:$0xf]
    %v379 = vld [vmem:[#allocation7 + $0x8] sm:$0xf]
    %v380 = vld [vmem:[#allocation7 + $0xc] sm:$0xf]
    %v381 = vld [vmem:[#allocation7 + $0x10] sm:$0xf]
    %v382 = vld [vmem:[#allocation7 + $0x14] sm:$0xf]
    %v383 = vld [vmem:[#allocation7 + $0x18] sm:$0xf]
    %v384 = vld [vmem:[#allocation7 + $0x1c] sm:$0xf]
    %v385 = vld [vmem:[#allocation7 + $0x20] sm:$0xf]
    %v386 = vld [vmem:[#allocation7 + $0x24] sm:$0xf]
    %v387 = vld [vmem:[#allocation7 + $0x28] sm:$0xf]
    %v388 = vld [vmem:[#allocation7 + $0x2c] sm:$0xf]
    %v389 = vld [vmem:[#allocation7 + $0x30] sm:$0xf]
    %v390 = vld [vmem:[#allocation7 + $0x34] sm:$0xf]
    %v391 = vld [vmem:[#allocation7 + $0x38] sm:$0xf]
    %v392 = vld [vmem:[#allocation7 + $0x3c] sm:$0xf]
    %v393 = vld [vmem:[%s6] sm:$0x1]
    %v394 = vld [vmem:[#allocation9] sm:$0xf]
    %v395 = vld [vmem:[#allocation9 + $0x4] sm:$0xf]
    %v396 = vld [vmem:[#allocation9 + $0x8] sm:$0xf]
    %v397 = vld [vmem:[#allocation9 + $0xc] sm:$0xf]
    %v398 = vld [vmem:[#allocation9 + $0x10] sm:$0xf]
    %v399 = vld [vmem:[#allocation9 + $0x14] sm:$0xf]
    %v400 = vld [vmem:[#allocation9 + $0x18] sm:$0xf]
    %v401 = vld [vmem:[#allocation9 + $0x1c] sm:$0xf]
    %v402 = vld [vmem:[#allocation9 + $0x20] sm:$0xf]
    %v403 = vld [vmem:[#allocation9 + $0x24] sm:$0xf]
    %v404 = vld [vmem:[#allocation9 + $0x28] sm:$0xf]
    %v405 = vld [vmem:[#allocation9 + $0x2c] sm:$0xf]
    %v406 = vld [vmem:[#allocation9 + $0x30] sm:$0xf]
    %v407 = vld [vmem:[#allocation9 + $0x34] sm:$0xf]
    %v408 = vld [vmem:[#allocation9 + $0x38] sm:$0xf]
    %v409 = vld [vmem:[#allocation9 + $0x3c] sm:$0xf]
    %v411 = vperm.slane %v393, 0
    %v429 = vunpack.c.l.b16 %v377
    %v430 = vunpack.c.l.b16 %v378
    %v431 = vunpack.c.l.b16 %v379
    %v432 = vunpack.c.l.b16 %v380
    %v433 = vunpack.c.l.b16 %v381
    %v434 = vunpack.c.l.b16 %v382
    %v435 = vunpack.c.l.b16 %v383
    %v436 = vunpack.c.l.b16 %v384
    %v437 = vunpack.c.l.b16 %v385
    %v438 = vunpack.c.l.b16 %v386
    %v439 = vunpack.c.l.b16 %v387
    %v440 = vunpack.c.l.b16 %v388
    %v441 = vunpack.c.l.b16 %v389
    %v442 = vunpack.c.l.b16 %v390
    %v443 = vunpack.c.l.b16 %v391
    %v444 = vunpack.c.l.b16 %v392
    %v445 = vpack.c.b16 %v430, %v429
    %v446 = vpack.c.b16 %v432, %v431
    %v447 = vpack.c.b16 %v434, %v433
    %v448 = vpack.c.b16 %v436, %v435
    %v449 = vpack.c.b16 %v438, %v437
    %v450 = vpack.c.b16 %v440, %v439
    %v451 = vpack.c.b16 %v442, %v441
    %v452 = vpack.c.b16 %v444, %v443
    %461 = vmatpush.bf16.xpose.msra.mxu0 %v452
    %462 = vmatpush.bf16.xpose.msra.mxu0 %v451
    %463 = vmatpush.bf16.xpose.msra.mxu0 %v450
    %464 = vmatpush.bf16.xpose.msra.mxu0 %v449
    %465 = vmatpush.bf16.xpose.msra.mxu0 %v448
    %466 = vmatpush.bf16.xpose.msra.mxu0 %v447
    %467 = vmatpush.bf16.xpose.msra.mxu0 %v446
    %468 = vmatpush.bf16.xpose.msra.mxu0 %v445
    %469 = vmatmul.bf16.gmra.mxu0 %v299
    %v470 = vpop.f32.mrf.mxu0
    %v471 = vadd.f32 %v411, %v470
    %v472 = vpop.f32.mrf.mxu0
    %473 = vdwg.mxu0
    %v474 = vmax.f32 %v471, 0.0
    %v475 = vpack.c.bf16 %v474, %v474
    %v492 = vunpack.c.l.b16 %v394
    %v493 = vunpack.c.l.b16 %v395
    %v494 = vunpack.c.l.b16 %v396
    %v495 = vunpack.c.l.b16 %v397
    %v496 = vunpack.c.l.b16 %v398
    %v497 = vunpack.c.l.b16 %v399
    %v498 = vunpack.c.l.b16 %v400
    %v499 = vunpack.c.l.b16 %v401
    %v500 = vunpack.c.l.b16 %v402
    %v501 = vunpack.c.l.b16 %v403
    %v502 = vunpack.c.l.b16 %v404
    %v503 = vunpack.c.l.b16 %v405
    %v504 = vunpack.c.l.b16 %v406
    %v505 = vunpack.c.l.b16 %v407
    %v506 = vunpack.c.l.b16 %v408
    %v507 = vunpack.c.l.b16 %v409
    %v508 = vpack.c.b16 %v493, %v492
    %v509 = vpack.c.b16 %v495, %v494
    %v510 = vpack.c.b16 %v497, %v496
    %v511 = vpack.c.b16 %v499, %v498
    %v512 = vpack.c.b16 %v501, %v500
    %v513 = vpack.c.b16 %v503, %v502
    %v514 = vpack.c.b16 %v505, %v504
    %v515 = vpack.c.b16 %v507, %v506
    %524 = vmatpush.bf16.xpose.msra.mxu0 %v515
    %525 = vmatpush.bf16.xpose.msra.mxu0 %v514
    %526 = vmatpush.bf16.xpose.msra.mxu0 %v513
    %527 = vmatpush.bf16.xpose.msra.mxu0 %v512
    %528 = vmatpush.bf16.xpose.msra.mxu0 %v511
    %529 = vmatpush.bf16.xpose.msra.mxu0 %v510
    %530 = vmatpush.bf16.xpose.msra.mxu0 %v509
    %531 = vmatpush.bf16.xpose.msra.mxu0 %v508
    %532 = vmatmul.bf16.gmra.mxu0 %v475
    %v533 = vpop.f32.mrf.mxu0
    %v534 = vadd.f32 0.0, %v533
    %v535 = vpop.f32.mrf.mxu0
    %536 = vdwg.mxu0
    %v537 = vmul.f32 %v534, %v534
    %538 = vadd.xlane.f32.xlu0 %v537
    %v539 = vpop.xlane.xlu0 %538
    %v540 = vadd.f32 %v539, 1e-10
    %v541 = vrsqrt.pop %v540
    %v542 = vmul.f32 %v541, %v540
    %v543 = vmul.f32 %v542, %v541
    %v544 = vmul.f32 0.5, %v543
    %v545 = vsub.f32 1.5, %v544
    %v546 = vmul.f32 %v541, %v545
    %vm547 = vweird.f32 %v540
    %vm548 = vweird.f32 %v541
    %vm549 = vmor %vm547, %vm548
    %v550 = vsel %vm549, %v541, %v546
    %v551 = vmul.f32 %v534, %v550
    %v552 = vadd.f32 %v376, %v551
    %553 = vst [vmem:[%s8] sm:$0xff] %v552
    // Predicated region
    $region54: #{combnet_forward.1} parent=1 // pred_check
      _
    $region55: #{combnet_forward.1} parent=1 // pred_check_branch
      %555 = sbr.rel (0) target = $region57
    $region56: #{combnet_forward.1} parent=1 // pred_region
      _
    $region57: #{combnet_forward.1} parent=1 // pred_fallthru
      _
    // Predicated region
    $region58: #{combnet_forward.1} parent=1 // pred_check
      _
    $region59: #{combnet_forward.1} parent=1 // pred_check_branch
      %557 = sbr.rel (0) target = $region61
    $region60: #{combnet_forward.1} parent=1 // pred_region
      _
    $region61: #{combnet_forward.1} parent=1 // pred_fallthru
      _
    %558 = vsyncpa [#allocation3], 1
    %559 = vsyncpa [#allocation5], 1
    %560 = vsyncpa [#allocation8], 1

</llo_original>
